<compile_context>
chip_gen: v7x
topology: tpu7x:2x2x1
jax: 0.10.0
libtpu: 0.0.40
codegen_flags: <defaults>
</compile_context>

<pallas_src>
from functools import partial

import jax
import jax.numpy as jnp
from jax.experimental import pallas as pl
from jax.experimental.pallas import tpu as pltpu


def _cheb_conv_sat_kernel(xT_ref, sat_ref, cheb_ref, thetaT_ref, o_ref):
    """One batch-block per grid step.

    xT_ref:     (Bb, T*F, N)  bf16  x[b, m, f, t] stored as [b, t*F + f, m]
    sat_ref:    (Bb, N, N)    f32   SAt[b, m, n]
    cheb_ref:   (K,  N, N)    f32   T_k[m, n]                     (grid-constant)
    thetaT_ref: (C,  K*F)     bf16  Theta[k, f, c] as [c, k*F + f] (grid-constant)
    o_ref:      (Bb, T, C, N) f32   relu(out)[b, n, c, t] stored as [b, t, c, n]
    """
    bb_block = xT_ref.shape[0]
    n_k = cheb_ref.shape[0]
    n_t = o_ref.shape[1]
    n_f = thetaT_ref.shape[1] // n_k

    theta_t = thetaT_ref[...]                                    # (C, K*F) bf16, ~KiB

    for bb in range(bb_block):                                   # Bb is small (default 1)
        x_bt = xT_ref[bb]                                        # (T*F, N) bf16
        sat_b = sat_ref[bb]                                      # (N, N)   f32

        # Graph matmul: one full-width MXU call per k covering every frame:
        #   r_k[t*F + f, n] = sum_m x[b, m, f, t] * (T_k[m, n] * SAt[b, m, n])
        # Contraction is LHS-lanes x RHS-sublanes (native MXU orientation, no
        # in-kernel transpose). The cheb (.) SAt multiply stays in f32 on the VPU.
        r_k = []
        for k in range(n_k):                                     # K is small (3)
            s_k = (cheb_ref[k] * sat_b).astype(jnp.bfloat16)     # (N, N)
            r = jnp.dot(x_bt, s_k, preferred_element_type=jnp.float32)
            r_k.append(r.astype(jnp.bfloat16))                   # (T*F, N)

        # Theta projection, one frame at a time. The K Chebyshev terms are folded
        # into a single contraction of length K*F via a sublane-aligned concat, so
        # the K-way accumulation happens inside the MXU accumulator.
        for t in range(n_t):                                     # T is small (8-12)
            rows_t = jnp.concatenate(
                [r[t * n_f:(t + 1) * n_f, :] for r in r_k], axis=0)     # (K*F, N) bf16
            out_t = jnp.dot(theta_t, rows_t,
                            preferred_element_type=jnp.float32)          # (C, N) f32
            o_ref[bb, t] = jnp.maximum(out_t, 0.0)                       # ReLU in f32


@partial(jax.jit, static_argnames=("batch_block",))
def cheb_conv_sat(x, spatial_attention, cheb_polynomials, theta, *, batch_block=1):
    """ASTGCN cheb_conv_SAT forward.

    x: (B, N, F, T); spatial_attention: (B, N, N);
    cheb_polynomials: (K, N, N); theta: (K, F, C).
    Returns relu output of shape (B, N, C, T) in float32.
    """
    B, N, F, T = x.shape
    K, F2, C = theta.shape
    if F2 != F:
        raise ValueError(f"theta features {F2} != x features {F}")
    if tuple(cheb_polynomials.shape) != (K, N, N):
        raise ValueError("cheb_polynomials must have shape (K, N, N)")
    if tuple(spatial_attention.shape) != (B, N, N):
        raise ValueError("spatial_attention must have shape (B, N, N)")
    if batch_block < 1 or B % batch_block != 0:
        raise ValueError(f"batch_block={batch_block} must divide batch size {B}")
    Bb = batch_block

    # Layout prep (single fused XLA transpose+cast passes, no redundant compute):
    #  * x -> (B, T*F, N) bf16: the graph matmul contracts nodes over all frames in one
    #    lane-dense MXU call per k, and each frame's Theta slice is a sublane-aligned
    #    row block (no strided lane gathers in the kernel).
    #  * Theta -> (C, K*F) bf16: the K Chebyshev terms share one contraction dimension.
    xT = jnp.transpose(x, (0, 3, 2, 1)).reshape(B, T * F, N).astype(jnp.bfloat16)
    thetaT = jnp.transpose(theta, (2, 0, 1)).reshape(C, K * F).astype(jnp.bfloat16)
    sat = spatial_attention.astype(jnp.float32)
    cheb = cheb_polynomials.astype(jnp.float32)

    out_tcn = pl.pallas_call(
        _cheb_conv_sat_kernel,
        out_shape=jax.ShapeDtypeStruct((B, T, C, N), jnp.float32),
        grid_spec=pltpu.PrefetchScalarGridSpec(
            num_scalar_prefetch=0,
            grid=(B // Bb,),
            in_specs=[
                pl.BlockSpec((Bb, T * F, N), lambda i: (i, 0, 0)),   # x (transposed, bf16)
                pl.BlockSpec((Bb, N, N), lambda i: (i, 0, 0)),       # spatial attention
                pl.BlockSpec((K, N, N), lambda i: (0, 0, 0)),        # Chebyshev polynomials
                pl.BlockSpec((C, K * F), lambda i: (0, 0)),          # Theta (stacked over k)
            ],
            out_specs=pl.BlockSpec((Bb, T, C, N), lambda i: (i, 0, 0, 0)),
        ),
        compiler_params=pltpu.CompilerParams(
            dimension_semantics=("parallel",)),
    )(xT, sat, cheb, thetaT)

    # (B, T, C, N) -> (B, N, C, T): one XLA transpose back to the module's output layout.
    return jnp.transpose(out_tcn, (0, 3, 2, 1))


def _reference(x, spatial_attention, cheb_polynomials, theta):
    """Pure-JAX f32 reference of the intended forward pass."""
    tk_at = cheb_polynomials[None, :, :, :] * spatial_attention[:, None, :, :]  # (B,K,N,N)
    rhs = jnp.einsum('bkmn,bmft->bknft', tk_at, x)          # (T_k (.) SAt)^T @ graph signal
    out = jnp.einsum('bknft,kfc->bnct', rhs, theta)
    return jax.nn.relu(out)                                 # (B, N, C, T)


if __name__ == "__main__":
    B, N, F, T = 2, 16, 4, 8      # batch, nodes, features, frames
    K, C = 3, 32                  # Chebyshev order, filters

    key = jax.random.PRNGKey(0)
    kx, ks, kc, kt = jax.random.split(key, 4)
    x = jax.random.normal(kx, (B, N, F, T), dtype=jnp.float32)
    spatial_attention = jax.random.normal(ks, (B, N, N), dtype=jnp.float32)
    cheb_polynomials = jax.random.normal(kc, (K, N, N), dtype=jnp.float32)
    theta = jax.random.normal(kt, (K, F, C), dtype=jnp.float32)

    out = jax.block_until_ready(
        cheb_conv_sat(x, spatial_attention, cheb_polynomials, theta))
    ref = _reference(x, spatial_attention, cheb_polynomials, theta)

    assert out.shape == (B, N, C, T)
    # bf16 MXU operands with f32 accumulation: allow bf16-level tolerance vs f32 reference.
    max_err = float(jnp.max(jnp.abs(out - ref)))
    assert jnp.allclose(out, ref, atol=5e-1, rtol=8e-2), f"mismatch, max abs err {max_err}"
    print("KERNEL_OK")
</pallas_src>

<mosaic_0001>
module attributes {stable_mosaic.version = 11 : i64} {
  func.func @_cheb_conv_sat_kernel(%arg0: i32, %arg1: memref<1x32x16xbf16, #tpu.memory_space<vmem>>, %arg2: memref<1x16x16xf32, #tpu.memory_space<vmem>>, %arg3: memref<3x16x16xf32, #tpu.memory_space<vmem>>, %arg4: memref<32x12xbf16, #tpu.memory_space<vmem>>, %arg5: memref<1x8x32x16xf32, #tpu.memory_space<vmem>>) attributes {dimension_semantics = [#tpu.dimension_semantics<parallel>], iteration_bounds = array<i64: 2>, scalar_prefetch = 0 : i64, scratch_operands = 0 : i64, tpu.core_type = #tpu.core_type<tc>, window_params = [{transform_indices = @transform_0, window_bounds = array<i64: 1, 32, 16>}, {transform_indices = @transform_1, window_bounds = array<i64: 1, 16, 16>}, {pipeline_mode = #tpu.pipeline_mode<synchronous>, transform_indices = @transform_2, window_bounds = array<i64: 3, 16, 16>}, {pipeline_mode = #tpu.pipeline_mode<synchronous>, transform_indices = @transform_3, window_bounds = array<i64: 32, 12>}, {transform_indices = @transform_4, window_bounds = array<i64: 1, 8, 32, 16>}]} {
    %c0 = arith.constant 0 : index
    %c0_0 = arith.constant 0 : index
    %0 = vector.load %arg4[%c0, %c0_0] : memref<32x12xbf16, #tpu.memory_space<vmem>>, vector<32x12xbf16>
    %c0_1 = arith.constant 0 : index
    %c0_2 = arith.constant 0 : index
    %c0_3 = arith.constant 0 : index
    %1 = vector.load %arg1[%c0_1, %c0_2, %c0_3] : memref<1x32x16xbf16, #tpu.memory_space<vmem>>, vector<1x32x16xbf16>
    %2 = vector.shape_cast %1 : vector<1x32x16xbf16> to vector<32x16xbf16>
    %c0_4 = arith.constant 0 : index
    %c0_5 = arith.constant 0 : index
    %c0_6 = arith.constant 0 : index
    %3 = vector.load %arg2[%c0_4, %c0_5, %c0_6] : memref<1x16x16xf32, #tpu.memory_space<vmem>>, vector<1x16x16xf32>
    %4 = vector.shape_cast %3 : vector<1x16x16xf32> to vector<16x16xf32>
    %c0_7 = arith.constant 0 : index
    %c0_8 = arith.constant 0 : index
    %c0_9 = arith.constant 0 : index
    %5 = vector.load %arg3[%c0_7, %c0_8, %c0_9] : memref<3x16x16xf32, #tpu.memory_space<vmem>>, vector<1x16x16xf32>
    %6 = vector.shape_cast %5 : vector<1x16x16xf32> to vector<16x16xf32>
    %7 = arith.mulf %6, %4 : vector<16x16xf32>
    %8 = arith.truncf %7 : vector<16x16xf32> to vector<16x16xbf16>
    %cst = arith.constant dense<0.000000e+00> : vector<32x16xf32>
    %9 = tpu.matmul %2, %8, %cst {dimension_numbers = #tpu.dot_dimension_numbers<[1], [0], [0], [1], [0, 0, 1, 1], [], []>} : vector<32x16xbf16>, vector<16x16xbf16>, vector<32x16xf32> -> vector<32x16xf32>
    %10 = arith.truncf %9 : vector<32x16xf32> to vector<32x16xbf16>
    %c1 = arith.constant 1 : index
    %c0_10 = arith.constant 0 : index
    %c0_11 = arith.constant 0 : index
    %11 = vector.load %arg3[%c1, %c0_10, %c0_11] : memref<3x16x16xf32, #tpu.memory_space<vmem>>, vector<1x16x16xf32>
    %12 = vector.shape_cast %11 : vector<1x16x16xf32> to vector<16x16xf32>
    %13 = arith.mulf %12, %4 : vector<16x16xf32>
    %14 = arith.truncf %13 : vector<16x16xf32> to vector<16x16xbf16>
    %cst_12 = arith.constant dense<0.000000e+00> : vector<32x16xf32>
    %15 = tpu.matmul %2, %14, %cst_12 {dimension_numbers = #tpu.dot_dimension_numbers<[1], [0], [0], [1], [0, 0, 1, 1], [], []>} : vector<32x16xbf16>, vector<16x16xbf16>, vector<32x16xf32> -> vector<32x16xf32>
    %16 = arith.truncf %15 : vector<32x16xf32> to vector<32x16xbf16>
    %c2 = arith.constant 2 : index
    %c0_13 = arith.constant 0 : index
    %c0_14 = arith.constant 0 : index
    %17 = vector.load %arg3[%c2, %c0_13, %c0_14] : memref<3x16x16xf32, #tpu.memory_space<vmem>>, vector<1x16x16xf32>
    %18 = vector.shape_cast %17 : vector<1x16x16xf32> to vector<16x16xf32>
    %19 = arith.mulf %18, %4 : vector<16x16xf32>
    %20 = arith.truncf %19 : vector<16x16xf32> to vector<16x16xbf16>
    %cst_15 = arith.constant dense<0.000000e+00> : vector<32x16xf32>
    %21 = tpu.matmul %2, %20, %cst_15 {dimension_numbers = #tpu.dot_dimension_numbers<[1], [0], [0], [1], [0, 0, 1, 1], [], []>} : vector<32x16xbf16>, vector<16x16xbf16>, vector<32x16xf32> -> vector<32x16xf32>
    %22 = arith.truncf %21 : vector<32x16xf32> to vector<32x16xbf16>
    %23 = vector.extract_strided_slice %10 {offsets = [0, 0], sizes = [4, 16], strides = [1, 1]} : vector<32x16xbf16> to vector<4x16xbf16>
    %24 = vector.extract_strided_slice %16 {offsets = [0, 0], sizes = [4, 16], strides = [1, 1]} : vector<32x16xbf16> to vector<4x16xbf16>
    %25 = vector.extract_strided_slice %22 {offsets = [0, 0], sizes = [4, 16], strides = [1, 1]} : vector<32x16xbf16> to vector<4x16xbf16>
    %26 = tpu.concatenate %23, %24, %25 in 0 : vector<4x16xbf16>, vector<4x16xbf16>, vector<4x16xbf16> -> vector<12x16xbf16>
    %cst_16 = arith.constant dense<0.000000e+00> : vector<32x16xf32>
    %27 = tpu.matmul %0, %26, %cst_16 {dimension_numbers = #tpu.dot_dimension_numbers<[1], [0], [0], [1], [0, 0, 1, 1], [], []>} : vector<32x12xbf16>, vector<12x16xbf16>, vector<32x16xf32> -> vector<32x16xf32>
    %cst_17 = arith.constant 0.000000e+00 : f32
    %28 = vector.broadcast %cst_17 : f32 to vector<32x16xf32>
    %29 = arith.maximumf %27, %28 : vector<32x16xf32>
    %c0_18 = arith.constant 0 : index
    %c0_19 = arith.constant 0 : index
    %c0_20 = arith.constant 0 : index
    %c0_21 = arith.constant 0 : index
    %30 = vector.load %arg5[%c0_18, %c0_19, %c0_20, %c0_21] : memref<1x8x32x16xf32, #tpu.memory_space<vmem>>, vector<1x1x32x16xf32>
    %31 = vector.shape_cast %30 : vector<1x1x32x16xf32> to vector<32x16xf32>
    %32 = vector.shape_cast %29 : vector<32x16xf32> to vector<1x1x32x16xf32>
    tpu.vector_store %arg5[%c0_18, %c0_19, %c0_20, %c0_21], %32 {strides = array<i32>} : memref<1x8x32x16xf32, #tpu.memory_space<vmem>>, vector<1x1x32x16xf32>,
    %33 = vector.extract_strided_slice %10 {offsets = [4, 0], sizes = [4, 16], strides = [1, 1]} : vector<32x16xbf16> to vector<4x16xbf16>
    %34 = vector.extract_strided_slice %16 {offsets = [4, 0], sizes = [4, 16], strides = [1, 1]} : vector<32x16xbf16> to vector<4x16xbf16>
    %35 = vector.extract_strided_slice %22 {offsets = [4, 0], sizes = [4, 16], strides = [1, 1]} : vector<32x16xbf16> to vector<4x16xbf16>
    %36 = tpu.concatenate %33, %34, %35 in 0 : vector<4x16xbf16>, vector<4x16xbf16>, vector<4x16xbf16> -> vector<12x16xbf16>
    %cst_22 = arith.constant dense<0.000000e+00> : vector<32x16xf32>
    %37 = tpu.matmul %0, %36, %cst_22 {dimension_numbers = #tpu.dot_dimension_numbers<[1], [0], [0], [1], [0, 0, 1, 1], [], []>} : vector<32x12xbf16>, vector<12x16xbf16>, vector<32x16xf32> -> vector<32x16xf32>
    %cst_23 = arith.constant 0.000000e+00 : f32
    %38 = vector.broadcast %cst_23 : f32 to vector<32x16xf32>
    %39 = arith.maximumf %37, %38 : vector<32x16xf32>
    %c0_24 = arith.constant 0 : index
    %c1_25 = arith.constant 1 : index
    %c0_26 = arith.constant 0 : index
    %c0_27 = arith.constant 0 : index
    %40 = vector.load %arg5[%c0_24, %c1_25, %c0_26, %c0_27] : memref<1x8x32x16xf32, #tpu.memory_space<vmem>>, vector<1x1x32x16xf32>
    %41 = vector.shape_cast %40 : vector<1x1x32x16xf32> to vector<32x16xf32>
    %42 = vector.shape_cast %39 : vector<32x16xf32> to vector<1x1x32x16xf32>
    tpu.vector_store %arg5[%c0_24, %c1_25, %c0_26, %c0_27], %42 {strides = array<i32>} : memref<1x8x32x16xf32, #tpu.memory_space<vmem>>, vector<1x1x32x16xf32>,
    %43 = vector.extract_strided_slice %10 {offsets = [8, 0], sizes = [4, 16], strides = [1, 1]} : vector<32x16xbf16> to vector<4x16xbf16>
    %44 = vector.extract_strided_slice %16 {offsets = [8, 0], sizes = [4, 16], strides = [1, 1]} : vector<32x16xbf16> to vector<4x16xbf16>
    %45 = vector.extract_strided_slice %22 {offsets = [8, 0], sizes = [4, 16], strides = [1, 1]} : vector<32x16xbf16> to vector<4x16xbf16>
    %46 = tpu.concatenate %43, %44, %45 in 0 : vector<4x16xbf16>, vector<4x16xbf16>, vector<4x16xbf16> -> vector<12x16xbf16>
    %cst_28 = arith.constant dense<0.000000e+00> : vector<32x16xf32>
    %47 = tpu.matmul %0, %46, %cst_28 {dimension_numbers = #tpu.dot_dimension_numbers<[1], [0], [0], [1], [0, 0, 1, 1], [], []>} : vector<32x12xbf16>, vector<12x16xbf16>, vector<32x16xf32> -> vector<32x16xf32>
    %cst_29 = arith.constant 0.000000e+00 : f32
    %48 = vector.broadcast %cst_29 : f32 to vector<32x16xf32>
    %49 = arith.maximumf %47, %48 : vector<32x16xf32>
    %c0_30 = arith.constant 0 : index
    %c2_31 = arith.constant 2 : index
    %c0_32 = arith.constant 0 : index
    %c0_33 = arith.constant 0 : index
    %50 = vector.load %arg5[%c0_30, %c2_31, %c0_32, %c0_33] : memref<1x8x32x16xf32, #tpu.memory_space<vmem>>, vector<1x1x32x16xf32>
    %51 = vector.shape_cast %50 : vector<1x1x32x16xf32> to vector<32x16xf32>
    %52 = vector.shape_cast %49 : vector<32x16xf32> to vector<1x1x32x16xf32>
    tpu.vector_store %arg5[%c0_30, %c2_31, %c0_32, %c0_33], %52 {strides = array<i32>} : memref<1x8x32x16xf32, #tpu.memory_space<vmem>>, vector<1x1x32x16xf32>,
    %53 = vector.extract_strided_slice %10 {offsets = [12, 0], sizes = [4, 16], strides = [1, 1]} : vector<32x16xbf16> to vector<4x16xbf16>
    %54 = vector.extract_strided_slice %16 {offsets = [12, 0], sizes = [4, 16], strides = [1, 1]} : vector<32x16xbf16> to vector<4x16xbf16>
    %55 = vector.extract_strided_slice %22 {offsets = [12, 0], sizes = [4, 16], strides = [1, 1]} : vector<32x16xbf16> to vector<4x16xbf16>
    %56 = tpu.concatenate %53, %54, %55 in 0 : vector<4x16xbf16>, vector<4x16xbf16>, vector<4x16xbf16> -> vector<12x16xbf16>
    %cst_34 = arith.constant dense<0.000000e+00> : vector<32x16xf32>
    %57 = tpu.matmul %0, %56, %cst_34 {dimension_numbers = #tpu.dot_dimension_numbers<[1], [0], [0], [1], [0, 0, 1, 1], [], []>} : vector<32x12xbf16>, vector<12x16xbf16>, vector<32x16xf32> -> vector<32x16xf32>
    %cst_35 = arith.constant 0.000000e+00 : f32
    %58 = vector.broadcast %cst_35 : f32 to vector<32x16xf32>
    %59 = arith.maximumf %57, %58 : vector<32x16xf32>
    %c0_36 = arith.constant 0 : index
    %c3 = arith.constant 3 : index
    %c0_37 = arith.constant 0 : index
    %c0_38 = arith.constant 0 : index
    %60 = vector.load %arg5[%c0_36, %c3, %c0_37, %c0_38] : memref<1x8x32x16xf32, #tpu.memory_space<vmem>>, vector<1x1x32x16xf32>
    %61 = vector.shape_cast %60 : vector<1x1x32x16xf32> to vector<32x16xf32>
    %62 = vector.shape_cast %59 : vector<32x16xf32> to vector<1x1x32x16xf32>
    tpu.vector_store %arg5[%c0_36, %c3, %c0_37, %c0_38], %62 {strides = array<i32>} : memref<1x8x32x16xf32, #tpu.memory_space<vmem>>, vector<1x1x32x16xf32>,
    %63 = vector.extract_strided_slice %10 {offsets = [16, 0], sizes = [4, 16], strides = [1, 1]} : vector<32x16xbf16> to vector<4x16xbf16>
    %64 = vector.extract_strided_slice %16 {offsets = [16, 0], sizes = [4, 16], strides = [1, 1]} : vector<32x16xbf16> to vector<4x16xbf16>
    %65 = vector.extract_strided_slice %22 {offsets = [16, 0], sizes = [4, 16], strides = [1, 1]} : vector<32x16xbf16> to vector<4x16xbf16>
    %66 = tpu.concatenate %63, %64, %65 in 0 : vector<4x16xbf16>, vector<4x16xbf16>, vector<4x16xbf16> -> vector<12x16xbf16>
    %cst_39 = arith.constant dense<0.000000e+00> : vector<32x16xf32>
    %67 = tpu.matmul %0, %66, %cst_39 {dimension_numbers = #tpu.dot_dimension_numbers<[1], [0], [0], [1], [0, 0, 1, 1], [], []>} : vector<32x12xbf16>, vector<12x16xbf16>, vector<32x16xf32> -> vector<32x16xf32>
    %cst_40 = arith.constant 0.000000e+00 : f32
    %68 = vector.broadcast %cst_40 : f32 to vector<32x16xf32>
    %69 = arith.maximumf %67, %68 : vector<32x16xf32>
    %c0_41 = arith.constant 0 : index
    %c4 = arith.constant 4 : index
    %c0_42 = arith.constant 0 : index
    %c0_43 = arith.constant 0 : index
    %70 = vector.load %arg5[%c0_41, %c4, %c0_42, %c0_43] : memref<1x8x32x16xf32, #tpu.memory_space<vmem>>, vector<1x1x32x16xf32>
    %71 = vector.shape_cast %70 : vector<1x1x32x16xf32> to vector<32x16xf32>
    %72 = vector.shape_cast %69 : vector<32x16xf32> to vector<1x1x32x16xf32>
    tpu.vector_store %arg5[%c0_41, %c4, %c0_42, %c0_43], %72 {strides = array<i32>} : memref<1x8x32x16xf32, #tpu.memory_space<vmem>>, vector<1x1x32x16xf32>,
    %73 = vector.extract_strided_slice %10 {offsets = [20, 0], sizes = [4, 16], strides = [1, 1]} : vector<32x16xbf16> to vector<4x16xbf16>
    %74 = vector.extract_strided_slice %16 {offsets = [20, 0], sizes = [4, 16], strides = [1, 1]} : vector<32x16xbf16> to vector<4x16xbf16>
    %75 = vector.extract_strided_slice %22 {offsets = [20, 0], sizes = [4, 16], strides = [1, 1]} : vector<32x16xbf16> to vector<4x16xbf16>
    %76 = tpu.concatenate %73, %74, %75 in 0 : vector<4x16xbf16>, vector<4x16xbf16>, vector<4x16xbf16> -> vector<12x16xbf16>
    %cst_44 = arith.constant dense<0.000000e+00> : vector<32x16xf32>
    %77 = tpu.matmul %0, %76, %cst_44 {dimension_numbers = #tpu.dot_dimension_numbers<[1], [0], [0], [1], [0, 0, 1, 1], [], []>} : vector<32x12xbf16>, vector<12x16xbf16>, vector<32x16xf32> -> vector<32x16xf32>
    %cst_45 = arith.constant 0.000000e+00 : f32
    %78 = vector.broadcast %cst_45 : f32 to vector<32x16xf32>
    %79 = arith.maximumf %77, %78 : vector<32x16xf32>
    %c0_46 = arith.constant 0 : index
    %c5 = arith.constant 5 : index
    %c0_47 = arith.constant 0 : index
    %c0_48 = arith.constant 0 : index
    %80 = vector.load %arg5[%c0_46, %c5, %c0_47, %c0_48] : memref<1x8x32x16xf32, #tpu.memory_space<vmem>>, vector<1x1x32x16xf32>
    %81 = vector.shape_cast %80 : vector<1x1x32x16xf32> to vector<32x16xf32>
    %82 = vector.shape_cast %79 : vector<32x16xf32> to vector<1x1x32x16xf32>
    tpu.vector_store %arg5[%c0_46, %c5, %c0_47, %c0_48], %82 {strides = array<i32>} : memref<1x8x32x16xf32, #tpu.memory_space<vmem>>, vector<1x1x32x16xf32>,
    %83 = vector.extract_strided_slice %10 {offsets = [24, 0], sizes = [4, 16], strides = [1, 1]} : vector<32x16xbf16> to vector<4x16xbf16>
    %84 = vector.extract_strided_slice %16 {offsets = [24, 0], sizes = [4, 16], strides = [1, 1]} : vector<32x16xbf16> to vector<4x16xbf16>
    %85 = vector.extract_strided_slice %22 {offsets = [24, 0], sizes = [4, 16], strides = [1, 1]} : vector<32x16xbf16> to vector<4x16xbf16>
    %86 = tpu.concatenate %83, %84, %85 in 0 : vector<4x16xbf16>, vector<4x16xbf16>, vector<4x16xbf16> -> vector<12x16xbf16>
    %cst_49 = arith.constant dense<0.000000e+00> : vector<32x16xf32>
    %87 = tpu.matmul %0, %86, %cst_49 {dimension_numbers = #tpu.dot_dimension_numbers<[1], [0], [0], [1], [0, 0, 1, 1], [], []>} : vector<32x12xbf16>, vector<12x16xbf16>, vector<32x16xf32> -> vector<32x16xf32>
    %cst_50 = arith.constant 0.000000e+00 : f32
    %88 = vector.broadcast %cst_50 : f32 to vector<32x16xf32>
    %89 = arith.maximumf %87, %88 : vector<32x16xf32>
    %c0_51 = arith.constant 0 : index
    %c6 = arith.constant 6 : index
    %c0_52 = arith.constant 0 : index
    %c0_53 = arith.constant 0 : index
    %90 = vector.load %arg5[%c0_51, %c6, %c0_52, %c0_53] : memref<1x8x32x16xf32, #tpu.memory_space<vmem>>, vector<1x1x32x16xf32>
    %91 = vector.shape_cast %90 : vector<1x1x32x16xf32> to vector<32x16xf32>
    %92 = vector.shape_cast %89 : vector<32x16xf32> to vector<1x1x32x16xf32>
    tpu.vector_store %arg5[%c0_51, %c6, %c0_52, %c0_53], %92 {strides = array<i32>} : memref<1x8x32x16xf32, #tpu.memory_space<vmem>>, vector<1x1x32x16xf32>,
    %93 = vector.extract_strided_slice %10 {offsets = [28, 0], sizes = [4, 16], strides = [1, 1]} : vector<32x16xbf16> to vector<4x16xbf16>
    %94 = vector.extract_strided_slice %16 {offsets = [28, 0], sizes = [4, 16], strides = [1, 1]} : vector<32x16xbf16> to vector<4x16xbf16>
    %95 = vector.extract_strided_slice %22 {offsets = [28, 0], sizes = [4, 16], strides = [1, 1]} : vector<32x16xbf16> to vector<4x16xbf16>
    %96 = tpu.concatenate %93, %94, %95 in 0 : vector<4x16xbf16>, vector<4x16xbf16>, vector<4x16xbf16> -> vector<12x16xbf16>
    %cst_54 = arith.constant dense<0.000000e+00> : vector<32x16xf32>
    %97 = tpu.matmul %0, %96, %cst_54 {dimension_numbers = #tpu.dot_dimension_numbers<[1], [0], [0], [1], [0, 0, 1, 1], [], []>} : vector<32x12xbf16>, vector<12x16xbf16>, vector<32x16xf32> -> vector<32x16xf32>
    %cst_55 = arith.constant 0.000000e+00 : f32
    %98 = vector.broadcast %cst_55 : f32 to vector<32x16xf32>
    %99 = arith.maximumf %97, %98 : vector<32x16xf32>
    %c0_56 = arith.constant 0 : index
    %c7 = arith.constant 7 : index
    %c0_57 = arith.constant 0 : index
    %c0_58 = arith.constant 0 : index
    %100 = vector.load %arg5[%c0_56, %c7, %c0_57, %c0_58] : memref<1x8x32x16xf32, #tpu.memory_space<vmem>>, vector<1x1x32x16xf32>
    %101 = vector.shape_cast %100 : vector<1x1x32x16xf32> to vector<32x16xf32>
    %102 = vector.shape_cast %99 : vector<32x16xf32> to vector<1x1x32x16xf32>
    tpu.vector_store %arg5[%c0_56, %c7, %c0_57, %c0_58], %102 {strides = array<i32>} : memref<1x8x32x16xf32, #tpu.memory_space<vmem>>, vector<1x1x32x16xf32>,
    return
  }
  func.func @transform_0(%arg0: i32) -> (i32, i32, i32) {
    %c0_i32 = arith.constant 0 : i32
    %c0_i32_0 = arith.constant 0 : i32
    %c0_i32_1 = arith.constant 0 : i32
    return %arg0, %c0_i32, %c0_i32_0 : i32, i32, i32
  }
  func.func @transform_1(%arg0: i32) -> (i32, i32, i32) {
    %c0_i32 = arith.constant 0 : i32
    %c0_i32_0 = arith.constant 0 : i32
    %c0_i32_1 = arith.constant 0 : i32
    return %arg0, %c0_i32, %c0_i32_0 : i32, i32, i32
  }
  func.func @transform_2(%arg0: i32) -> (i32, i32, i32) {
    %c0_i32 = arith.constant 0 : i32
    %c0_i32_0 = arith.constant 0 : i32
    %c0_i32_1 = arith.constant 0 : i32
    %c0_i32_2 = arith.constant 0 : i32
    return %c0_i32, %c0_i32_0, %c0_i32_1 : i32, i32, i32
  }
  func.func @transform_3(%arg0: i32) -> (i32, i32) {
    %c0_i32 = arith.constant 0 : i32
    %c0_i32_0 = arith.constant 0 : i32
    %c0_i32_1 = arith.constant 0 : i32
    return %c0_i32, %c0_i32_0 : i32, i32
  }
  func.func @transform_4(%arg0: i32) -> (i32, i32, i32, i32) {
    %c0_i32 = arith.constant 0 : i32
    %c0_i32_0 = arith.constant 0 : i32
    %c0_i32_1 = arith.constant 0 : i32
    %c0_i32_2 = arith.constant 0 : i32
    return %arg0, %c0_i32, %c0_i32_0, %c0_i32_1 : i32, i32, i32, i32
  }
}

</mosaic_0001>

<llo_original>
// kernel: cheb_conv_sat.1
$region0: #{cheb_conv_sat.1}
  #allocation0 [shape = 'u32[]', space=smem, size = 0x4, offset = 0x4, fixed_abs, tag = 'smem constant byte address 0x4 - core index']
  #allocation1 [shape = 'u32[144,128]{1,0:T(1,128)}', space=vmem, size = 0x12000, scoped, tag = 'internal scratch']
  %s0 = inlined_call_operand.vmem [shape: bf16[2,32,16], index: 0, kind: input, shape index: {}]
  %s1 = inlined_call_operand.vmem [shape: f32[2,16,16], index: 1, kind: input, shape index: {}]
  %s2 = inlined_call_operand.vmem [shape: f32[3,16,16], index: 2, kind: input, shape index: {}]
  %s3 = inlined_call_operand.vmem [shape: bf16[32,12], index: 3, kind: input, shape index: {}]
  %s4 = inlined_call_operand.vmem [shape: f32[2,8,32,16], index: 4, kind: output, shape index: {}]
  %s5 = sld [smem:[#allocation0]]
  $region49: #{cheb_conv_sat.1} parent=0
    _
  %s7 = ssub.s32 1, %s5
  %s8 = scalar_select 0, %s7, %s5
  loop: start=0, step=1, limit=4
  $region2: #{cheb_conv_sat.1} parent=0 // loop_pre_header
    _
  $region3: #{cheb_conv_sat.1} parent=0 // loop_header
    %s10 = sphi 0, %s14
    %p11 = scmp.ge.s32.totalorder %s10, 4
    %s20 = sphi 0, %s22
    %s23 = sphi 0, %s20
    %s24 = sphi 0, %s23
    %s40 = sphi 0, %s24
    %s46 = sphi 0, %s48
    %s49 = sphi 0, %s46
    %s50 = sphi 0, %s49
    %s66 = sphi 0, %s50
    %s70 = sphi 0, %s70
    %s72 = sphi 0, %s70
    %s73 = sphi 0, %s72
    %s87 = sphi 0, %s73
    %s91 = sphi 0, %s91
    %s93 = sphi 0, %s91
    %s94 = sphi 0, %s93
    %s108 = sphi 0, %s94
    %s114 = sphi 0, %s116
    %s117 = sphi 0, %s114
    %s118 = sphi 0, %s117
    %s134 = sphi 0, %s118
  $region4: #{cheb_conv_sat.1} parent=0 // loop_header_branch
    %13 = sbr.rel (%p11) target = $region8
  $region5: #{cheb_conv_sat.1} parent=0 // loop_body
    %s15 = ssub.s32 %s10, 1
    %s16 = ssub.s32 %s10, 2
    %s17 = sadd.s32 %s10, 1
    %s18 = ssub.s32 %s10, %s17
    %p19 = scmp.eq.s32.totalorder %s18, 0
    %s21 = sadd.s32 %s20, 1
    %s22 = scalar_select %p19, %s20, %s21
    %p25 = pneg %p19
    %p26 = scmp.eq.s32.totalorder %s10, 1
    %p27 = por %p25, %p26
    %p28 = scmp.ne.s32.totalorder %s20, %s23
    %p29 = scmp.eq.s32.totalorder %s10, 0
    %p30 = por %p28, %p29
    %p31 = scmp.ne.s32.totalorder %s20, %s23
    %p32 = scmp.eq.s32.totalorder %s15, 1
    %p33 = por %p31, %p32
    %p34 = scmp.ne.s32.totalorder %s23, %s24
    %p35 = scmp.eq.s32.totalorder %s15, 0
    %p36 = por %p34, %p35
    %p37 = scmp.ne.s32.totalorder %s23, %s24
    %p38 = scmp.eq.s32.totalorder %s16, 1
    %p39 = por %p37, %p38
    %p41 = scmp.ne.s32.totalorder %s24, %s40
    %p42 = scmp.eq.s32.totalorder %s16, 0
    %p43 = por %p41, %p42
    %s44 = ssub.s32 %s10, %s17
    %p45 = scmp.eq.s32.totalorder %s44, 0
    %s47 = sadd.s32 %s46, 1
    %s48 = scalar_select %p45, %s46, %s47
    %p51 = pneg %p45
    %p52 = scmp.eq.s32.totalorder %s10, 1
    %p53 = por %p51, %p52
    %p54 = scmp.ne.s32.totalorder %s46, %s49
    %p55 = scmp.eq.s32.totalorder %s10, 0
    %p56 = por %p54, %p55
    %p57 = scmp.ne.s32.totalorder %s46, %s49
    %p58 = scmp.eq.s32.totalorder %s15, 1
    %p59 = por %p57, %p58
    %p60 = scmp.ne.s32.totalorder %s49, %s50
    %p61 = scmp.eq.s32.totalorder %s15, 0
    %p62 = por %p60, %p61
    %p63 = scmp.ne.s32.totalorder %s49, %s50
    %p64 = scmp.eq.s32.totalorder %s16, 1
    %p65 = por %p63, %p64
    %p67 = scmp.ne.s32.totalorder %s50, %s66
    %p68 = scmp.eq.s32.totalorder %s16, 0
    %p69 = por %p67, %p68
    %s71 = sadd.s32 %s70, 1
    %p74 = scmp.eq.s32.totalorder %s10, 1
    %p75 = scmp.ne.s32.totalorder %s70, %s72
    %p76 = scmp.eq.s32.totalorder %s10, 0
    %p77 = por %p75, %p76
    %p78 = scmp.ne.s32.totalorder %s70, %s72
    %p79 = scmp.eq.s32.totalorder %s15, 1
    %p80 = por %p78, %p79
    %p81 = scmp.ne.s32.totalorder %s72, %s73
    %p82 = scmp.eq.s32.totalorder %s15, 0
    %p83 = por %p81, %p82
    %p84 = scmp.ne.s32.totalorder %s72, %s73
    %p85 = scmp.eq.s32.totalorder %s16, 1
    %p86 = por %p84, %p85
    %p88 = scmp.ne.s32.totalorder %s73, %s87
    %p89 = scmp.eq.s32.totalorder %s16, 0
    %p90 = por %p88, %p89
    %s92 = sadd.s32 %s91, 1
    %p95 = scmp.eq.s32.totalorder %s10, 1
    %p96 = scmp.ne.s32.totalorder %s91, %s93
    %p97 = scmp.eq.s32.totalorder %s10, 0
    %p98 = por %p96, %p97
    %p99 = scmp.ne.s32.totalorder %s91, %s93
    %p100 = scmp.eq.s32.totalorder %s15, 1
    %p101 = por %p99, %p100
    %p102 = scmp.ne.s32.totalorder %s93, %s94
    %p103 = scmp.eq.s32.totalorder %s15, 0
    %p104 = por %p102, %p103
    %p105 = scmp.ne.s32.totalorder %s93, %s94
    %p106 = scmp.eq.s32.totalorder %s16, 1
    %p107 = por %p105, %p106
    %p109 = scmp.ne.s32.totalorder %s94, %s108
    %p110 = scmp.eq.s32.totalorder %s16, 0
    %p111 = por %p109, %p110
    %s112 = ssub.s32 %s10, %s17
    %p113 = scmp.eq.s32.totalorder %s112, 0
    %s115 = sadd.s32 %s114, 1
    %s116 = scalar_select %p113, %s114, %s115
    %p119 = pneg %p113
    %p120 = scmp.eq.s32.totalorder %s10, 1
    %p121 = por %p119, %p120
    %p122 = scmp.ne.s32.totalorder %s114, %s117
    %p123 = scmp.eq.s32.totalorder %s10, 0
    %p124 = por %p122, %p123
    %p125 = scmp.ne.s32.totalorder %s114, %s117
    %p126 = scmp.eq.s32.totalorder %s15, 1
    %p127 = por %p125, %p126
    %p128 = scmp.ne.s32.totalorder %s117, %s118
    %p129 = scmp.eq.s32.totalorder %s15, 0
    %p130 = por %p128, %p129
    %p131 = scmp.ne.s32.totalorder %s117, %s118
    %p132 = scmp.eq.s32.totalorder %s16, 1
    %p133 = por %p131, %p132
    %p135 = scmp.ne.s32.totalorder %s118, %s134
    %p136 = scmp.eq.s32.totalorder %s16, 0
    %p137 = por %p135, %p136
    %p138 = scmp.le.s32.totalorder 1, %s10
    %p139 = scmp.lt.s32.totalorder %s10, 3
    %p140 = pnand %p138, %p139
    %p141 = pneg %p140
    // Predicated region
    $region9: #{cheb_conv_sat.1} parent=5 // pred_check
      _
    $region10: #{cheb_conv_sat.1} parent=5 // pred_check_branch
      %143 = sbr.rel (%p140) target = $region12
    $region11: #{cheb_conv_sat.1} parent=5 // pred_region
      %s144 = ssub.s32 %s10, 1
      // Predicated region
      $region13: #{cheb_conv_sat.1} parent=11 // pred_check
        %p145 = pneg %p83
      $region14: #{cheb_conv_sat.1} parent=11 // pred_check_branch
        %147 = sbr.rel (%p145) target = $region16
      $region15: #{cheb_conv_sat.1} parent=11 // pred_region
        _
      $region16: #{cheb_conv_sat.1} parent=11 // pred_fallthru
        _
      // Predicated region
      $region17: #{cheb_conv_sat.1} parent=11 // pred_check
        %p148 = pneg %p104
      $region18: #{cheb_conv_sat.1} parent=11 // pred_check_branch
        %150 = sbr.rel (%p148) target = $region20
      $region19: #{cheb_conv_sat.1} parent=11 // pred_region
        _
      $region20: #{cheb_conv_sat.1} parent=11 // pred_fallthru
        _
    $region12: #{cheb_conv_sat.1} parent=5 // pred_fallthru
      _
    %p151 = scmp.lt.s32.totalorder %s10, 2
    // Predicated region
    $region21: #{cheb_conv_sat.1} parent=5 // pred_check
      %p152 = pneg %p151
    $region22: #{cheb_conv_sat.1} parent=5 // pred_check_branch
      %154 = sbr.rel (%p152) target = $region24
    $region23: #{cheb_conv_sat.1} parent=5 // pred_region
      // Predicated region
      $region25: #{cheb_conv_sat.1} parent=23 // pred_check
        %p155 = pneg %p30
      $region26: #{cheb_conv_sat.1} parent=23 // pred_check_branch
        %157 = sbr.rel (%p155) target = $region28
      $region27: #{cheb_conv_sat.1} parent=23 // pred_region
        %p158 = scmp.lt.s32.totalorder %s10, 1
        %s159 = scalar_select %p158, %s10, 1
        %s160 = smul.addr %s159, 4
        %s161 = smul.addr %s160, 4
        %s162 = scalar_lea.vmem %s0, %s161
      $region28: #{cheb_conv_sat.1} parent=23 // pred_fallthru
        _
      // Predicated region
      $region29: #{cheb_conv_sat.1} parent=23 // pred_check
        %p163 = pneg %p56
      $region30: #{cheb_conv_sat.1} parent=23 // pred_check_branch
        %165 = sbr.rel (%p163) target = $region32
      $region31: #{cheb_conv_sat.1} parent=23 // pred_region
        %p166 = scmp.lt.s32.totalorder %s10, 1
        %s167 = scalar_select %p166, %s10, 1
        %s168 = smul.addr %s167, 2
        %s169 = smul.addr %s168, 8
        %s170 = scalar_lea.vmem %s1, %s169
      $region32: #{cheb_conv_sat.1} parent=23 // pred_fallthru
        _
    $region24: #{cheb_conv_sat.1} parent=5 // pred_fallthru
      _
    %p171 = scmp.le.s32.totalorder 1, %s10
    %p172 = scmp.lt.s32.totalorder %s10, 3
    %p173 = pnand %p171, %p172
    %p174 = pneg %p173
    // Predicated region
    $region33: #{cheb_conv_sat.1} parent=5 // pred_check
      _
    $region34: #{cheb_conv_sat.1} parent=5 // pred_check_branch
      %176 = sbr.rel (%p173) target = $region36
    $region35: #{cheb_conv_sat.1} parent=5 // pred_region
      %s177 = ssub.s32 %s10, 1
      %p178 = scmp.lt.s32.totalorder %s15, 1
      %s179 = scalar_select %p178, %s15, 1
      %s180 = smul.addr %s179, 4
      %s181 = smul.addr %s180, 4
      %s182 = scalar_lea.vmem %s0, %s181
      %p183 = pneg %p36
      %p184 = pneg %p33
      %p185 = scmp.lt.s32.totalorder %s15, 1
      %s186 = scalar_select %p185, %s15, 1
      %s187 = smul.addr %s186, 2
      %s188 = smul.addr %s187, 8
      %s189 = scalar_lea.vmem %s1, %s188
      %p190 = pneg %p62
      %p191 = pneg %p59
      %p192 = pneg %p83
      %p193 = pneg %p80
      %p194 = pneg %p104
      %p195 = pneg %p101
      %p196 = pneg %p130
      %p197 = pneg %p127
      %p198 = scmp.lt.s32.totalorder %s15, 1
      %s199 = scalar_select %p198, %s15, 1
      %s200 = smul.addr %s199, 32
      %s201 = smul.addr %s200, 8
      %s202 = scalar_lea.vmem %s4, %s201
      %p203 = scmp.lt.s32.totalorder %s15, 1
      %s204 = scalar_select %p203, %s15, 1
      %s205 = smul.addr %s204, 4
      %s206 = smul.addr %s205, 4
      %s207 = scalar_lea.vmem %s0, %s206
      %p208 = scmp.lt.s32.totalorder %s15, 1
      %s209 = scalar_select %p208, %s15, 1
      %s210 = smul.addr %s209, 2
      %s211 = smul.addr %s210, 8
      %s212 = scalar_lea.vmem %s1, %s211
      %p213 = scmp.lt.s32.totalorder %s15, 1
      %s214 = scalar_select %p213, %s15, 1
      %s215 = smul.addr %s214, 32
      %s216 = smul.addr %s215, 8
      %s217 = scalar_lea.vmem %s4, %s216
      %v219 = vld [vmem:[%s3] sm:$0xf]
      %v220 = vld [vmem:[%s3 + $0x4] sm:$0xf]
      %v221 = vld [vmem:[%s3 + $0x8] sm:$0xf]
      %v222 = vld [vmem:[%s3 + $0xc] sm:$0xf]
      %v223 = vld [vmem:[%s207] sm:$0xf]
      %v224 = vld [vmem:[%s207 + $0x4] sm:$0xf]
      %v225 = vld [vmem:[%s207 + $0x8] sm:$0xf]
      %v226 = vld [vmem:[%s207 + $0xc] sm:$0xf]
      %v227 = vld [vmem:[%s212] sm:$0xff]
      %v228 = vld [vmem:[%s212 + $0x8] sm:$0xff]
      %v229 = vld [vmem:[%s2] sm:$0xff]
      %v230 = vld [vmem:[%s2 + $0x8] sm:$0xff]
      %v231 = vmul.f32 %v229, %v227
      %v232 = vmul.f32 %v230, %v228
      %v233 = vpack.c.bf16 %v232, %v231
      %v238 = vunpack.c.l.b16 %v223
      %v239 = vunpack.c.l.b16 %v224
      %v240 = vunpack.c.l.b16 %v225
      %v241 = vunpack.c.l.b16 %v226
      %v242 = vpack.c.b16 %v239, %v238
      %v243 = vpack.c.b16 %v241, %v240
      %vm244 = vcmask 130048
      %v246 = vsel %vm244, %v242, 0
      %v249 = vsel %vm244, %v243, 0
      %251 = vmatprep.subr.bf16.mxu0 0
      %252 = vmatpush1.bf16.msra.mxu0 %v233
      %253 = vmatprep.subr.bf16.mxu0 0
      %254 = vmatpush1.bf16.msra.mxu0 0
      %255 = vmatprep.subr.bf16.mxu0 0
      %256 = vmatpush1.bf16.msra.mxu0 0
      %257 = vmatprep.subr.bf16.mxu0 0
      %258 = vmatpush1.bf16.msra.mxu0 0
      %259 = vmatprep.subr.bf16.mxu0 0
      %260 = vmatpush1.bf16.msra.mxu0 0
      %261 = vmatprep.subr.bf16.mxu0 0
      %262 = vmatpush1.bf16.msra.mxu0 0
      %263 = vmatprep.subr.bf16.mxu0 0
      %264 = vmatpush1.bf16.msra.mxu0 0
      %265 = vmatprep.subr.bf16.mxu0 0
      %266 = vmatpush1.bf16.msra.mxu0 0
      %267 = vmatprep.subr.bf16.mxu0 0
      %268 = vmatpush1.bf16.msra.mxu0 0
      %269 = vmatprep.subr.bf16.mxu0 0
      %270 = vmatpush1.bf16.msra.mxu0 0
      %271 = vmatprep.subr.bf16.mxu0 0
      %272 = vmatpush1.bf16.msra.mxu0 0
      %273 = vmatprep.subr.bf16.mxu0 0
      %274 = vmatpush1.bf16.msra.mxu0 0
      %275 = vmatprep.subr.bf16.mxu0 0
      %276 = vmatpush1.bf16.msra.mxu0 0
      %277 = vmatprep.subr.bf16.mxu0 0
      %278 = vmatpush1.bf16.msra.mxu0 0
      %279 = vmatprep.subr.bf16.mxu0 0
      %280 = vmatpush1.bf16.msra.mxu0 0
      %281 = vmatprep.subr.bf16.mxu0 0
      %282 = vmatpush1.bf16.msra.mxu0 0
      %283 = vmatprep.mubr.bf16.mxu0 0
      %284 = vmatmul.mubr.bf16.gmra.mrb[0].mxu0 %v246
      %v285 = vpop.f32.mrb[0].mxu0
      %v286 = vadd.f32 0.0, %v285
      %v287 = vpop.f32.mrb[0].mxu0
      %v288 = vpop.f32.mrb[0].mxu0
      %v289 = vadd.f32 0.0, %v288
      %v290 = vpop.f32.mrb[0].mxu0
      %291 = vmatprep.mubr.bf16.mxu0 0
      %292 = vmatmul.mubr.bf16.gmra.mrb[0].mxu0 %v249
      %v293 = vpop.f32.mrb[0].mxu0
      %v294 = vadd.f32 0.0, %v293
      %v295 = vpop.f32.mrb[0].mxu0
      %v296 = vpop.f32.mrb[0].mxu0
      %v297 = vadd.f32 0.0, %v296
      %v298 = vpop.f32.mrb[0].mxu0
      %299 = vdwg.mxu0
      %v300 = vpack.c.bf16 %v289, %v286
      %v301 = vpack.c.bf16 %v297, %v294
      %s302 = scalar_lea.vmem %s2, 16
      %v303 = vld [vmem:[%s302] sm:$0xff]
      %v304 = vld [vmem:[%s302 + $0x8] sm:$0xff]
      %v305 = vmul.f32 %v303, %v227
      %v306 = vmul.f32 %v304, %v228
      %v307 = vpack.c.bf16 %v306, %v305
      %308 = vmatprep.subr.bf16.mxu0 0
      %309 = vmatpush1.bf16.msra.mxu0 %v307
      %310 = vmatprep.subr.bf16.mxu0 0
      %311 = vmatpush1.bf16.msra.mxu0 0
      %312 = vmatprep.subr.bf16.mxu0 0
      %313 = vmatpush1.bf16.msra.mxu0 0
      %314 = vmatprep.subr.bf16.mxu0 0
      %315 = vmatpush1.bf16.msra.mxu0 0
      %316 = vmatprep.subr.bf16.mxu0 0
      %317 = vmatpush1.bf16.msra.mxu0 0
      %318 = vmatprep.subr.bf16.mxu0 0
      %319 = vmatpush1.bf16.msra.mxu0 0
      %320 = vmatprep.subr.bf16.mxu0 0
      %321 = vmatpush1.bf16.msra.mxu0 0
      %322 = vmatprep.subr.bf16.mxu0 0
      %323 = vmatpush1.bf16.msra.mxu0 0
      %324 = vmatprep.subr.bf16.mxu0 0
      %325 = vmatpush1.bf16.msra.mxu0 0
      %326 = vmatprep.subr.bf16.mxu0 0
      %327 = vmatpush1.bf16.msra.mxu0 0
      %328 = vmatprep.subr.bf16.mxu0 0
      %329 = vmatpush1.bf16.msra.mxu0 0
      %330 = vmatprep.subr.bf16.mxu0 0
      %331 = vmatpush1.bf16.msra.mxu0 0
      %332 = vmatprep.subr.bf16.mxu0 0
      %333 = vmatpush1.bf16.msra.mxu0 0
      %334 = vmatprep.subr.bf16.mxu0 0
      %335 = vmatpush1.bf16.msra.mxu0 0
      %336 = vmatprep.subr.bf16.mxu0 0
      %337 = vmatpush1.bf16.msra.mxu0 0
      %338 = vmatprep.subr.bf16.mxu0 0
      %339 = vmatpush1.bf16.msra.mxu0 0
      %340 = vmatprep.mubr.bf16.mxu0 0
      %341 = vmatmul.mubr.bf16.gmra.mrb[0].mxu0 %v246
      %v342 = vpop.f32.mrb[0].mxu0
      %v343 = vadd.f32 0.0, %v342
      %v344 = vpop.f32.mrb[0].mxu0
      %v345 = vpop.f32.mrb[0].mxu0
      %v346 = vadd.f32 0.0, %v345
      %v347 = vpop.f32.mrb[0].mxu0
      %348 = vmatprep.mubr.bf16.mxu0 0
      %349 = vmatmul.mubr.bf16.gmra.mrb[0].mxu0 %v249
      %v350 = vpop.f32.mrb[0].mxu0
      %v351 = vadd.f32 0.0, %v350
      %v352 = vpop.f32.mrb[0].mxu0
      %v353 = vpop.f32.mrb[0].mxu0
      %v354 = vadd.f32 0.0, %v353
      %v355 = vpop.f32.mrb[0].mxu0
      %356 = vdwg.mxu0
      %v357 = vpack.c.bf16 %v346, %v343
      %v358 = vpack.c.bf16 %v354, %v351
      %s359 = scalar_lea.vmem %s2, 32
      %v360 = vld [vmem:[%s359] sm:$0xff]
      %v361 = vld [vmem:[%s359 + $0x8] sm:$0xff]
      %v362 = vmul.f32 %v360, %v227
      %v363 = vmul.f32 %v361, %v228
      %v364 = vpack.c.bf16 %v363, %v362
      %365 = vmatprep.subr.bf16.mxu0 0
      %366 = vmatpush1.bf16.msra.mxu0 %v364
      %367 = vmatprep.subr.bf16.mxu0 0
      %368 = vmatpush1.bf16.msra.mxu0 0
      %369 = vmatprep.subr.bf16.mxu0 0
      %370 = vmatpush1.bf16.msra.mxu0 0
      %371 = vmatprep.subr.bf16.mxu0 0
      %372 = vmatpush1.bf16.msra.mxu0 0
      %373 = vmatprep.subr.bf16.mxu0 0
      %374 = vmatpush1.bf16.msra.mxu0 0
      %375 = vmatprep.subr.bf16.mxu0 0
      %376 = vmatpush1.bf16.msra.mxu0 0
      %377 = vmatprep.subr.bf16.mxu0 0
      %378 = vmatpush1.bf16.msra.mxu0 0
      %379 = vmatprep.subr.bf16.mxu0 0
      %380 = vmatpush1.bf16.msra.mxu0 0
      %381 = vmatprep.subr.bf16.mxu0 0
      %382 = vmatpush1.bf16.msra.mxu0 0
      %383 = vmatprep.subr.bf16.mxu0 0
      %384 = vmatpush1.bf16.msra.mxu0 0
      %385 = vmatprep.subr.bf16.mxu0 0
      %386 = vmatpush1.bf16.msra.mxu0 0
      %387 = vmatprep.subr.bf16.mxu0 0
      %388 = vmatpush1.bf16.msra.mxu0 0
      %389 = vmatprep.subr.bf16.mxu0 0
      %390 = vmatpush1.bf16.msra.mxu0 0
      %391 = vmatprep.subr.bf16.mxu0 0
      %392 = vmatpush1.bf16.msra.mxu0 0
      %393 = vmatprep.subr.bf16.mxu0 0
      %394 = vmatpush1.bf16.msra.mxu0 0
      %395 = vmatprep.subr.bf16.mxu0 0
      %396 = vmatpush1.bf16.msra.mxu0 0
      %397 = vmatprep.mubr.bf16.mxu0 0
      %398 = vmatmul.mubr.bf16.gmra.mrb[0].mxu0 %v246
      %v399 = vpop.f32.mrb[0].mxu0
      %v400 = vadd.f32 0.0, %v399
      %v401 = vpop.f32.mrb[0].mxu0
      %v402 = vpop.f32.mrb[0].mxu0
      %v403 = vadd.f32 0.0, %v402
      %v404 = vpop.f32.mrb[0].mxu0
      %405 = vmatprep.mubr.bf16.mxu0 0
      %406 = vmatmul.mubr.bf16.gmra.mrb[0].mxu0 %v249
      %v407 = vpop.f32.mrb[0].mxu0
      %v408 = vadd.f32 0.0, %v407
      %v409 = vpop.f32.mrb[0].mxu0
      %v410 = vpop.f32.mrb[0].mxu0
      %v411 = vadd.f32 0.0, %v410
      %v412 = vpop.f32.mrb[0].mxu0
      %413 = vdwg.mxu0
      %v414 = vpack.c.bf16 %v403, %v400
      %v415 = vpack.c.bf16 %v411, %v408
      %v417 = vrot.slane %v357, 6
      %v419 = vrot.slane %v414, 4
      %vm420 = vcmask 1041408
      %v423 = vsel %vm420, %v300, %v417
      %vm424 = vcmask 1043456
      %v426 = vsel %vm424, %v423, %v419
      %v431 = vunpack.c.l.b16 %v219
      %v432 = vunpack.c.l.b16 %v220
      %v433 = vunpack.c.l.b16 %v221
      %v434 = vunpack.c.l.b16 %v222
      %v435 = vpack.c.b16 %v432, %v431
      %v436 = vpack.c.b16 %v434, %v433
      %vm437 = vcmask 97280
      %v439 = vsel %vm437, %v435, 0
      %v442 = vsel %vm437, %v436, 0
      %vm444 = vcmask 1045504
      %v445 = vsel %vm444, %v426, 0
      %447 = vmatprep.subr.bf16.mxu0 0
      %448 = vmatpush1.bf16.msra.mxu0 %v445
      %449 = vmatprep.subr.bf16.mxu0 0
      %450 = vmatpush1.bf16.msra.mxu0 0
      %451 = vmatprep.subr.bf16.mxu0 0
      %452 = vmatpush1.bf16.msra.mxu0 0
      %453 = vmatprep.subr.bf16.mxu0 0
      %454 = vmatpush1.bf16.msra.mxu0 0
      %455 = vmatprep.subr.bf16.mxu0 0
      %456 = vmatpush1.bf16.msra.mxu0 0
      %457 = vmatprep.subr.bf16.mxu0 0
      %458 = vmatpush1.bf16.msra.mxu0 0
      %459 = vmatprep.subr.bf16.mxu0 0
      %460 = vmatpush1.bf16.msra.mxu0 0
      %461 = vmatprep.subr.bf16.mxu0 0
      %462 = vmatpush1.bf16.msra.mxu0 0
      %463 = vmatprep.subr.bf16.mxu0 0
      %464 = vmatpush1.bf16.msra.mxu0 0
      %465 = vmatprep.subr.bf16.mxu0 0
      %466 = vmatpush1.bf16.msra.mxu0 0
      %467 = vmatprep.subr.bf16.mxu0 0
      %468 = vmatpush1.bf16.msra.mxu0 0
      %469 = vmatprep.subr.bf16.mxu0 0
      %470 = vmatpush1.bf16.msra.mxu0 0
      %471 = vmatprep.subr.bf16.mxu0 0
      %472 = vmatpush1.bf16.msra.mxu0 0
      %473 = vmatprep.subr.bf16.mxu0 0
      %474 = vmatpush1.bf16.msra.mxu0 0
      %475 = vmatprep.subr.bf16.mxu0 0
      %476 = vmatpush1.bf16.msra.mxu0 0
      %477 = vmatprep.subr.bf16.mxu0 0
      %478 = vmatpush1.bf16.msra.mxu0 0
      %479 = vmatprep.mubr.bf16.mxu0 0
      %480 = vmatmul.mubr.bf16.gmra.mrb[0].mxu0 %v439
      %v481 = vpop.f32.mrb[0].mxu0
      %v482 = vadd.f32 0.0, %v481
      %v483 = vpop.f32.mrb[0].mxu0
      %v484 = vpop.f32.mrb[0].mxu0
      %v485 = vadd.f32 0.0, %v484
      %v486 = vpop.f32.mrb[0].mxu0
      %487 = vmatprep.mubr.bf16.mxu0 0
      %488 = vmatmul.mubr.bf16.gmra.mrb[0].mxu0 %v442
      %v489 = vpop.f32.mrb[0].mxu0
      %v490 = vadd.f32 0.0, %v489
      %v491 = vpop.f32.mrb[0].mxu0
      %v492 = vpop.f32.mrb[0].mxu0
      %v493 = vadd.f32 0.0, %v492
      %v494 = vpop.f32.mrb[0].mxu0
      %495 = vdwg.mxu0
      %v496 = vmax.f32 %v482, 0.0
      %v497 = vmax.f32 %v485, 0.0
      %v498 = vmax.f32 %v490, 0.0
      %v499 = vmax.f32 %v493, 0.0
      %500 = vst.msk [vmem:[%s217] sm:$0xff] %vm244, %v496
      %501 = vst.msk [vmem:[%s217 + $0x8] sm:$0xff] %vm244, %v497
      %502 = vst.msk [vmem:[%s217 + $0x10] sm:$0xff] %vm244, %v498
      %503 = vst.msk [vmem:[%s217 + $0x18] sm:$0xff] %vm244, %v499
      %v505 = vrot.slane %v300, 2
      %v506 = vrot.slane %v414, 6
      %v509 = vsel %vm420, %v505, %v357
      %v511 = vsel %vm424, %v509, %v506
      %v512 = vsel %vm444, %v511, 0
      %514 = vmatprep.subr.bf16.mxu0 0
      %515 = vmatpush1.bf16.msra.mxu0 %v512
      %516 = vmatprep.subr.bf16.mxu0 0
      %517 = vmatpush1.bf16.msra.mxu0 0
      %518 = vmatprep.subr.bf16.mxu0 0
      %519 = vmatpush1.bf16.msra.mxu0 0
      %520 = vmatprep.subr.bf16.mxu0 0
      %521 = vmatpush1.bf16.msra.mxu0 0
      %522 = vmatprep.subr.bf16.mxu0 0
      %523 = vmatpush1.bf16.msra.mxu0 0
      %524 = vmatprep.subr.bf16.mxu0 0
      %525 = vmatpush1.bf16.msra.mxu0 0
      %526 = vmatprep.subr.bf16.mxu0 0
      %527 = vmatpush1.bf16.msra.mxu0 0
      %528 = vmatprep.subr.bf16.mxu0 0
      %529 = vmatpush1.bf16.msra.mxu0 0
      %530 = vmatprep.subr.bf16.mxu0 0
      %531 = vmatpush1.bf16.msra.mxu0 0
      %532 = vmatprep.subr.bf16.mxu0 0
      %533 = vmatpush1.bf16.msra.mxu0 0
      %534 = vmatprep.subr.bf16.mxu0 0
      %535 = vmatpush1.bf16.msra.mxu0 0
      %536 = vmatprep.subr.bf16.mxu0 0
      %537 = vmatpush1.bf16.msra.mxu0 0
      %538 = vmatprep.subr.bf16.mxu0 0
      %539 = vmatpush1.bf16.msra.mxu0 0
      %540 = vmatprep.subr.bf16.mxu0 0
      %541 = vmatpush1.bf16.msra.mxu0 0
      %542 = vmatprep.subr.bf16.mxu0 0
      %543 = vmatpush1.bf16.msra.mxu0 0
      %544 = vmatprep.subr.bf16.mxu0 0
      %545 = vmatpush1.bf16.msra.mxu0 0
      %546 = vmatprep.mubr.bf16.mxu0 0
      %547 = vmatmul.mubr.bf16.gmra.mrb[0].mxu0 %v439
      %v548 = vpop.f32.mrb[0].mxu0
      %v549 = vadd.f32 0.0, %v548
      %v550 = vpop.f32.mrb[0].mxu0
      %v551 = vpop.f32.mrb[0].mxu0
      %v552 = vadd.f32 0.0, %v551
      %v553 = vpop.f32.mrb[0].mxu0
      %554 = vmatprep.mubr.bf16.mxu0 0
      %555 = vmatmul.mubr.bf16.gmra.mrb[0].mxu0 %v442
      %v556 = vpop.f32.mrb[0].mxu0
      %v557 = vadd.f32 0.0, %v556
      %v558 = vpop.f32.mrb[0].mxu0
      %v559 = vpop.f32.mrb[0].mxu0
      %v560 = vadd.f32 0.0, %v559
      %v561 = vpop.f32.mrb[0].mxu0
      %562 = vdwg.mxu0
      %v563 = vmax.f32 %v549, 0.0
      %v564 = vmax.f32 %v552, 0.0
      %v565 = vmax.f32 %v557, 0.0
      %v566 = vmax.f32 %v560, 0.0
      %s567 = scalar_lea.vmem %s217, 32
      %568 = vst.msk [vmem:[%s567] sm:$0xff] %vm244, %v563
      %569 = vst.msk [vmem:[%s567 + $0x8] sm:$0xff] %vm244, %v564
      %570 = vst.msk [vmem:[%s567 + $0x10] sm:$0xff] %vm244, %v565
      %571 = vst.msk [vmem:[%s567 + $0x18] sm:$0xff] %vm244, %v566
      %v572 = vrot.slane %v300, 4
      %v573 = vrot.slane %v357, 2
      %v576 = vsel %vm420, %v572, %v573
      %v578 = vsel %vm424, %v576, %v414
      %v579 = vsel %vm444, %v578, 0
      %581 = vmatprep.subr.bf16.mxu0 0
      %582 = vmatpush1.bf16.msra.mxu0 %v579
      %583 = vmatprep.subr.bf16.mxu0 0
      %584 = vmatpush1.bf16.msra.mxu0 0
      %585 = vmatprep.subr.bf16.mxu0 0
      %586 = vmatpush1.bf16.msra.mxu0 0
      %587 = vmatprep.subr.bf16.mxu0 0
      %588 = vmatpush1.bf16.msra.mxu0 0
      %589 = vmatprep.subr.bf16.mxu0 0
      %590 = vmatpush1.bf16.msra.mxu0 0
      %591 = vmatprep.subr.bf16.mxu0 0
      %592 = vmatpush1.bf16.msra.mxu0 0
      %593 = vmatprep.subr.bf16.mxu0 0
      %594 = vmatpush1.bf16.msra.mxu0 0
      %595 = vmatprep.subr.bf16.mxu0 0
      %596 = vmatpush1.bf16.msra.mxu0 0
      %597 = vmatprep.subr.bf16.mxu0 0
      %598 = vmatpush1.bf16.msra.mxu0 0
      %599 = vmatprep.subr.bf16.mxu0 0
      %600 = vmatpush1.bf16.msra.mxu0 0
      %601 = vmatprep.subr.bf16.mxu0 0
      %602 = vmatpush1.bf16.msra.mxu0 0
      %603 = vmatprep.subr.bf16.mxu0 0
      %604 = vmatpush1.bf16.msra.mxu0 0
      %605 = vmatprep.subr.bf16.mxu0 0
      %606 = vmatpush1.bf16.msra.mxu0 0
      %607 = vmatprep.subr.bf16.mxu0 0
      %608 = vmatpush1.bf16.msra.mxu0 0
      %609 = vmatprep.subr.bf16.mxu0 0
      %610 = vmatpush1.bf16.msra.mxu0 0
      %611 = vmatprep.subr.bf16.mxu0 0
      %612 = vmatpush1.bf16.msra.mxu0 0
      %613 = vmatprep.mubr.bf16.mxu0 0
      %614 = vmatmul.mubr.bf16.gmra.mrb[0].mxu0 %v439
      %v615 = vpop.f32.mrb[0].mxu0
      %v616 = vadd.f32 0.0, %v615
      %v617 = vpop.f32.mrb[0].mxu0
      %v618 = vpop.f32.mrb[0].mxu0
      %v619 = vadd.f32 0.0, %v618
      %v620 = vpop.f32.mrb[0].mxu0
      %621 = vmatprep.mubr.bf16.mxu0 0
      %622 = vmatmul.mubr.bf16.gmra.mrb[0].mxu0 %v442
      %v623 = vpop.f32.mrb[0].mxu0
      %v624 = vadd.f32 0.0, %v623
      %v625 = vpop.f32.mrb[0].mxu0
      %v626 = vpop.f32.mrb[0].mxu0
      %v627 = vadd.f32 0.0, %v626
      %v628 = vpop.f32.mrb[0].mxu0
      %629 = vdwg.mxu0
      %v630 = vmax.f32 %v616, 0.0
      %v631 = vmax.f32 %v619, 0.0
      %v632 = vmax.f32 %v624, 0.0
      %v633 = vmax.f32 %v627, 0.0
      %s634 = scalar_lea.vmem %s217, 64
      %635 = vst.msk [vmem:[%s634] sm:$0xff] %vm244, %v630
      %636 = vst.msk [vmem:[%s634 + $0x8] sm:$0xff] %vm244, %v631
      %637 = vst.msk [vmem:[%s634 + $0x10] sm:$0xff] %vm244, %v632
      %638 = vst.msk [vmem:[%s634 + $0x18] sm:$0xff] %vm244, %v633
      %v639 = vrot.slane %v300, 6
      %v640 = vrot.slane %v357, 4
      %v641 = vrot.slane %v414, 2
      %v644 = vsel %vm420, %v639, %v640
      %v646 = vsel %vm424, %v644, %v641
      %v647 = vsel %vm444, %v646, 0
      %649 = vmatprep.subr.bf16.mxu0 0
      %650 = vmatpush1.bf16.msra.mxu0 %v647
      %651 = vmatprep.subr.bf16.mxu0 0
      %652 = vmatpush1.bf16.msra.mxu0 0
      %653 = vmatprep.subr.bf16.mxu0 0
      %654 = vmatpush1.bf16.msra.mxu0 0
      %655 = vmatprep.subr.bf16.mxu0 0
      %656 = vmatpush1.bf16.msra.mxu0 0
      %657 = vmatprep.subr.bf16.mxu0 0
      %658 = vmatpush1.bf16.msra.mxu0 0
      %659 = vmatprep.subr.bf16.mxu0 0
      %660 = vmatpush1.bf16.msra.mxu0 0
      %661 = vmatprep.subr.bf16.mxu0 0
      %662 = vmatpush1.bf16.msra.mxu0 0
      %663 = vmatprep.subr.bf16.mxu0 0
      %664 = vmatpush1.bf16.msra.mxu0 0
      %665 = vmatprep.subr.bf16.mxu0 0
      %666 = vmatpush1.bf16.msra.mxu0 0
      %667 = vmatprep.subr.bf16.mxu0 0
      %668 = vmatpush1.bf16.msra.mxu0 0
      %669 = vmatprep.subr.bf16.mxu0 0
      %670 = vmatpush1.bf16.msra.mxu0 0
      %671 = vmatprep.subr.bf16.mxu0 0
      %672 = vmatpush1.bf16.msra.mxu0 0
      %673 = vmatprep.subr.bf16.mxu0 0
      %674 = vmatpush1.bf16.msra.mxu0 0
      %675 = vmatprep.subr.bf16.mxu0 0
      %676 = vmatpush1.bf16.msra.mxu0 0
      %677 = vmatprep.subr.bf16.mxu0 0
      %678 = vmatpush1.bf16.msra.mxu0 0
      %679 = vmatprep.subr.bf16.mxu0 0
      %680 = vmatpush1.bf16.msra.mxu0 0
      %681 = vmatprep.mubr.bf16.mxu0 0
      %682 = vmatmul.mubr.bf16.gmra.mrb[0].mxu0 %v439
      %v683 = vpop.f32.mrb[0].mxu0
      %v684 = vadd.f32 0.0, %v683
      %v685 = vpop.f32.mrb[0].mxu0
      %v686 = vpop.f32.mrb[0].mxu0
      %v687 = vadd.f32 0.0, %v686
      %v688 = vpop.f32.mrb[0].mxu0
      %689 = vmatprep.mubr.bf16.mxu0 0
      %690 = vmatmul.mubr.bf16.gmra.mrb[0].mxu0 %v442
      %v691 = vpop.f32.mrb[0].mxu0
      %v692 = vadd.f32 0.0, %v691
      %v693 = vpop.f32.mrb[0].mxu0
      %v694 = vpop.f32.mrb[0].mxu0
      %v695 = vadd.f32 0.0, %v694
      %v696 = vpop.f32.mrb[0].mxu0
      %697 = vdwg.mxu0
      %v698 = vmax.f32 %v684, 0.0
      %v699 = vmax.f32 %v687, 0.0
      %v700 = vmax.f32 %v692, 0.0
      %v701 = vmax.f32 %v695, 0.0
      %s702 = scalar_lea.vmem %s217, 96
      %703 = vst.msk [vmem:[%s702] sm:$0xff] %vm244, %v698
      %704 = vst.msk [vmem:[%s702 + $0x8] sm:$0xff] %vm244, %v699
      %705 = vst.msk [vmem:[%s702 + $0x10] sm:$0xff] %vm244, %v700
      %706 = vst.msk [vmem:[%s702 + $0x18] sm:$0xff] %vm244, %v701
      %v708 = vrot.slane %v358, 6
      %v710 = vrot.slane %v415, 4
      %v713 = vsel %vm420, %v301, %v708
      %v715 = vsel %vm424, %v713, %v710
      %v716 = vsel %vm444, %v715, 0
      %718 = vmatprep.subr.bf16.mxu0 0
      %719 = vmatpush1.bf16.msra.mxu0 %v716
      %720 = vmatprep.subr.bf16.mxu0 0
      %721 = vmatpush1.bf16.msra.mxu0 0
      %722 = vmatprep.subr.bf16.mxu0 0
      %723 = vmatpush1.bf16.msra.mxu0 0
      %724 = vmatprep.subr.bf16.mxu0 0
      %725 = vmatpush1.bf16.msra.mxu0 0
      %726 = vmatprep.subr.bf16.mxu0 0
      %727 = vmatpush1.bf16.msra.mxu0 0
      %728 = vmatprep.subr.bf16.mxu0 0
      %729 = vmatpush1.bf16.msra.mxu0 0
      %730 = vmatprep.subr.bf16.mxu0 0
      %731 = vmatpush1.bf16.msra.mxu0 0
      %732 = vmatprep.subr.bf16.mxu0 0
      %733 = vmatpush1.bf16.msra.mxu0 0
      %734 = vmatprep.subr.bf16.mxu0 0
      %735 = vmatpush1.bf16.msra.mxu0 0
      %736 = vmatprep.subr.bf16.mxu0 0
      %737 = vmatpush1.bf16.msra.mxu0 0
      %738 = vmatprep.subr.bf16.mxu0 0
      %739 = vmatpush1.bf16.msra.mxu0 0
      %740 = vmatprep.subr.bf16.mxu0 0
      %741 = vmatpush1.bf16.msra.mxu0 0
      %742 = vmatprep.subr.bf16.mxu0 0
      %743 = vmatpush1.bf16.msra.mxu0 0
      %744 = vmatprep.subr.bf16.mxu0 0
      %745 = vmatpush1.bf16.msra.mxu0 0
      %746 = vmatprep.subr.bf16.mxu0 0
      %747 = vmatpush1.bf16.msra.mxu0 0
      %748 = vmatprep.subr.bf16.mxu0 0
      %749 = vmatpush1.bf16.msra.mxu0 0
      %750 = vmatprep.mubr.bf16.mxu0 0
      %751 = vmatmul.mubr.bf16.gmra.mrb[0].mxu0 %v439
      %v752 = vpop.f32.mrb[0].mxu0
      %v753 = vadd.f32 0.0, %v752
      %v754 = vpop.f32.mrb[0].mxu0
      %v755 = vpop.f32.mrb[0].mxu0
      %v756 = vadd.f32 0.0, %v755
      %v757 = vpop.f32.mrb[0].mxu0
      %758 = vmatprep.mubr.bf16.mxu0 0
      %759 = vmatmul.mubr.bf16.gmra.mrb[0].mxu0 %v442
      %v760 = vpop.f32.mrb[0].mxu0
      %v761 = vadd.f32 0.0, %v760
      %v762 = vpop.f32.mrb[0].mxu0
      %v763 = vpop.f32.mrb[0].mxu0
      %v764 = vadd.f32 0.0, %v763
      %v765 = vpop.f32.mrb[0].mxu0
      %766 = vdwg.mxu0
      %v767 = vmax.f32 %v753, 0.0
      %v768 = vmax.f32 %v756, 0.0
      %v769 = vmax.f32 %v761, 0.0
      %v770 = vmax.f32 %v764, 0.0
      %s771 = scalar_lea.vmem %s217, 128
      %772 = vst.msk [vmem:[%s771] sm:$0xff] %vm244, %v767
      %773 = vst.msk [vmem:[%s771 + $0x8] sm:$0xff] %vm244, %v768
      %774 = vst.msk [vmem:[%s771 + $0x10] sm:$0xff] %vm244, %v769
      %775 = vst.msk [vmem:[%s771 + $0x18] sm:$0xff] %vm244, %v770
      %v777 = vrot.slane %v301, 2
      %v778 = vrot.slane %v415, 6
      %v781 = vsel %vm420, %v777, %v358
      %v783 = vsel %vm424, %v781, %v778
      %v784 = vsel %vm444, %v783, 0
      %786 = vmatprep.subr.bf16.mxu0 0
      %787 = vmatpush1.bf16.msra.mxu0 %v784
      %788 = vmatprep.subr.bf16.mxu0 0
      %789 = vmatpush1.bf16.msra.mxu0 0
      %790 = vmatprep.subr.bf16.mxu0 0
      %791 = vmatpush1.bf16.msra.mxu0 0
      %792 = vmatprep.subr.bf16.mxu0 0
      %793 = vmatpush1.bf16.msra.mxu0 0
      %794 = vmatprep.subr.bf16.mxu0 0
      %795 = vmatpush1.bf16.msra.mxu0 0
      %796 = vmatprep.subr.bf16.mxu0 0
      %797 = vmatpush1.bf16.msra.mxu0 0
      %798 = vmatprep.subr.bf16.mxu0 0
      %799 = vmatpush1.bf16.msra.mxu0 0
      %800 = vmatprep.subr.bf16.mxu0 0
      %801 = vmatpush1.bf16.msra.mxu0 0
      %802 = vmatprep.subr.bf16.mxu0 0
      %803 = vmatpush1.bf16.msra.mxu0 0
      %804 = vmatprep.subr.bf16.mxu0 0
      %805 = vmatpush1.bf16.msra.mxu0 0
      %806 = vmatprep.subr.bf16.mxu0 0
      %807 = vmatpush1.bf16.msra.mxu0 0
      %808 = vmatprep.subr.bf16.mxu0 0
      %809 = vmatpush1.bf16.msra.mxu0 0
      %810 = vmatprep.subr.bf16.mxu0 0
      %811 = vmatpush1.bf16.msra.mxu0 0
      %812 = vmatprep.subr.bf16.mxu0 0
      %813 = vmatpush1.bf16.msra.mxu0 0
      %814 = vmatprep.subr.bf16.mxu0 0
      %815 = vmatpush1.bf16.msra.mxu0 0
      %816 = vmatprep.subr.bf16.mxu0 0
      %817 = vmatpush1.bf16.msra.mxu0 0
      %818 = vmatprep.mubr.bf16.mxu0 0
      %819 = vmatmul.mubr.bf16.gmra.mrb[0].mxu0 %v439
      %v820 = vpop.f32.mrb[0].mxu0
      %v821 = vadd.f32 0.0, %v820
      %v822 = vpop.f32.mrb[0].mxu0
      %v823 = vpop.f32.mrb[0].mxu0
      %v824 = vadd.f32 0.0, %v823
      %v825 = vpop.f32.mrb[0].mxu0
      %826 = vmatprep.mubr.bf16.mxu0 0
      %827 = vmatmul.mubr.bf16.gmra.mrb[0].mxu0 %v442
      %v828 = vpop.f32.mrb[0].mxu0
      %v829 = vadd.f32 0.0, %v828
      %v830 = vpop.f32.mrb[0].mxu0
      %v831 = vpop.f32.mrb[0].mxu0
      %v832 = vadd.f32 0.0, %v831
      %v833 = vpop.f32.mrb[0].mxu0
      %834 = vdwg.mxu0
      %v835 = vmax.f32 %v821, 0.0
      %v836 = vmax.f32 %v824, 0.0
      %v837 = vmax.f32 %v829, 0.0
      %v838 = vmax.f32 %v832, 0.0
      %s839 = scalar_lea.vmem %s217, 160
      %840 = vst.msk [vmem:[%s839] sm:$0xff] %vm244, %v835
      %841 = vst.msk [vmem:[%s839 + $0x8] sm:$0xff] %vm244, %v836
      %842 = vst.msk [vmem:[%s839 + $0x10] sm:$0xff] %vm244, %v837
      %843 = vst.msk [vmem:[%s839 + $0x18] sm:$0xff] %vm244, %v838
      %v844 = vrot.slane %v301, 4
      %v845 = vrot.slane %v358, 2
      %v848 = vsel %vm420, %v844, %v845
      %v850 = vsel %vm424, %v848, %v415
      %v851 = vsel %vm444, %v850, 0
      %853 = vmatprep.subr.bf16.mxu0 0
      %854 = vmatpush1.bf16.msra.mxu0 %v851
      %855 = vmatprep.subr.bf16.mxu0 0
      %856 = vmatpush1.bf16.msra.mxu0 0
      %857 = vmatprep.subr.bf16.mxu0 0
      %858 = vmatpush1.bf16.msra.mxu0 0
      %859 = vmatprep.subr.bf16.mxu0 0
      %860 = vmatpush1.bf16.msra.mxu0 0
      %861 = vmatprep.subr.bf16.mxu0 0
      %862 = vmatpush1.bf16.msra.mxu0 0
      %863 = vmatprep.subr.bf16.mxu0 0
      %864 = vmatpush1.bf16.msra.mxu0 0
      %865 = vmatprep.subr.bf16.mxu0 0
      %866 = vmatpush1.bf16.msra.mxu0 0
      %867 = vmatprep.subr.bf16.mxu0 0
      %868 = vmatpush1.bf16.msra.mxu0 0
      %869 = vmatprep.subr.bf16.mxu0 0
      %870 = vmatpush1.bf16.msra.mxu0 0
      %871 = vmatprep.subr.bf16.mxu0 0
      %872 = vmatpush1.bf16.msra.mxu0 0
      %873 = vmatprep.subr.bf16.mxu0 0
      %874 = vmatpush1.bf16.msra.mxu0 0
      %875 = vmatprep.subr.bf16.mxu0 0
      %876 = vmatpush1.bf16.msra.mxu0 0
      %877 = vmatprep.subr.bf16.mxu0 0
      %878 = vmatpush1.bf16.msra.mxu0 0
      %879 = vmatprep.subr.bf16.mxu0 0
      %880 = vmatpush1.bf16.msra.mxu0 0
      %881 = vmatprep.subr.bf16.mxu0 0
      %882 = vmatpush1.bf16.msra.mxu0 0
      %883 = vmatprep.subr.bf16.mxu0 0
      %884 = vmatpush1.bf16.msra.mxu0 0
      %885 = vmatprep.mubr.bf16.mxu0 0
      %886 = vmatmul.mubr.bf16.gmra.mrb[0].mxu0 %v439
      %v887 = vpop.f32.mrb[0].mxu0
      %v888 = vadd.f32 0.0, %v887
      %v889 = vpop.f32.mrb[0].mxu0
      %v890 = vpop.f32.mrb[0].mxu0
      %v891 = vadd.f32 0.0, %v890
      %v892 = vpop.f32.mrb[0].mxu0
      %893 = vmatprep.mubr.bf16.mxu0 0
      %894 = vmatmul.mubr.bf16.gmra.mrb[0].mxu0 %v442
      %v895 = vpop.f32.mrb[0].mxu0
      %v896 = vadd.f32 0.0, %v895
      %v897 = vpop.f32.mrb[0].mxu0
      %v898 = vpop.f32.mrb[0].mxu0
      %v899 = vadd.f32 0.0, %v898
      %v900 = vpop.f32.mrb[0].mxu0
      %901 = vdwg.mxu0
      %v902 = vmax.f32 %v888, 0.0
      %v903 = vmax.f32 %v891, 0.0
      %v904 = vmax.f32 %v896, 0.0
      %v905 = vmax.f32 %v899, 0.0
      %s906 = scalar_lea.vmem %s217, 192
      %907 = vst.msk [vmem:[%s906] sm:$0xff] %vm244, %v902
      %908 = vst.msk [vmem:[%s906 + $0x8] sm:$0xff] %vm244, %v903
      %909 = vst.msk [vmem:[%s906 + $0x10] sm:$0xff] %vm244, %v904
      %910 = vst.msk [vmem:[%s906 + $0x18] sm:$0xff] %vm244, %v905
      %v911 = vrot.slane %v301, 6
      %v912 = vrot.slane %v358, 4
      %v913 = vrot.slane %v415, 2
      %v916 = vsel %vm420, %v911, %v912
      %v918 = vsel %vm424, %v916, %v913
      %v919 = vsel %vm444, %v918, 0
      %921 = vmatprep.subr.bf16.mxu0 0
      %922 = vmatpush1.bf16.msra.mxu0 %v919
      %923 = vmatprep.subr.bf16.mxu0 0
      %924 = vmatpush1.bf16.msra.mxu0 0
      %925 = vmatprep.subr.bf16.mxu0 0
      %926 = vmatpush1.bf16.msra.mxu0 0
      %927 = vmatprep.subr.bf16.mxu0 0
      %928 = vmatpush1.bf16.msra.mxu0 0
      %929 = vmatprep.subr.bf16.mxu0 0
      %930 = vmatpush1.bf16.msra.mxu0 0
      %931 = vmatprep.subr.bf16.mxu0 0
      %932 = vmatpush1.bf16.msra.mxu0 0
      %933 = vmatprep.subr.bf16.mxu0 0
      %934 = vmatpush1.bf16.msra.mxu0 0
      %935 = vmatprep.subr.bf16.mxu0 0
      %936 = vmatpush1.bf16.msra.mxu0 0
      %937 = vmatprep.subr.bf16.mxu0 0
      %938 = vmatpush1.bf16.msra.mxu0 0
      %939 = vmatprep.subr.bf16.mxu0 0
      %940 = vmatpush1.bf16.msra.mxu0 0
      %941 = vmatprep.subr.bf16.mxu0 0
      %942 = vmatpush1.bf16.msra.mxu0 0
      %943 = vmatprep.subr.bf16.mxu0 0
      %944 = vmatpush1.bf16.msra.mxu0 0
      %945 = vmatprep.subr.bf16.mxu0 0
      %946 = vmatpush1.bf16.msra.mxu0 0
      %947 = vmatprep.subr.bf16.mxu0 0
      %948 = vmatpush1.bf16.msra.mxu0 0
      %949 = vmatprep.subr.bf16.mxu0 0
      %950 = vmatpush1.bf16.msra.mxu0 0
      %951 = vmatprep.subr.bf16.mxu0 0
      %952 = vmatpush1.bf16.msra.mxu0 0
      %953 = vmatprep.mubr.bf16.mxu0 0
      %954 = vmatmul.mubr.bf16.gmra.mrb[0].mxu0 %v439
      %v955 = vpop.f32.mrb[0].mxu0
      %v956 = vadd.f32 0.0, %v955
      %v957 = vpop.f32.mrb[0].mxu0
      %v958 = vpop.f32.mrb[0].mxu0
      %v959 = vadd.f32 0.0, %v958
      %v960 = vpop.f32.mrb[0].mxu0
      %961 = vmatprep.mubr.bf16.mxu0 0
      %962 = vmatmul.mubr.bf16.gmra.mrb[0].mxu0 %v442
      %v963 = vpop.f32.mrb[0].mxu0
      %v964 = vadd.f32 0.0, %v963
      %v965 = vpop.f32.mrb[0].mxu0
      %v966 = vpop.f32.mrb[0].mxu0
      %v967 = vadd.f32 0.0, %v966
      %v968 = vpop.f32.mrb[0].mxu0
      %969 = vdwg.mxu0
      %v970 = vmax.f32 %v956, 0.0
      %v971 = vmax.f32 %v959, 0.0
      %v972 = vmax.f32 %v964, 0.0
      %v973 = vmax.f32 %v967, 0.0
      %s974 = scalar_lea.vmem %s217, 224
      %975 = vst.msk [vmem:[%s974] sm:$0xff] %vm244, %v970
      %976 = vst.msk [vmem:[%s974 + $0x8] sm:$0xff] %vm244, %v971
      %977 = vst.msk [vmem:[%s974 + $0x10] sm:$0xff] %vm244, %v972
      %978 = vst.msk [vmem:[%s974 + $0x18] sm:$0xff] %vm244, %v973
      %p979 = scmp.lt.s32.totalorder %s15, 1
      %s980 = scalar_select %p979, %s15, 1
      %s981 = smul.addr %s980, 32
      %s982 = smul.addr %s981, 8
      %s983 = scalar_lea.vmem %s4, %s982
      // Predicated region
      $region37: #{cheb_conv_sat.1} parent=35 // pred_check
        %p984 = pneg %p127
      $region38: #{cheb_conv_sat.1} parent=35 // pred_check_branch
        %986 = sbr.rel (%p984) target = $region40
      $region39: #{cheb_conv_sat.1} parent=35 // pred_region
        _
      $region40: #{cheb_conv_sat.1} parent=35 // pred_fallthru
        _
    $region36: #{cheb_conv_sat.1} parent=5 // pred_fallthru
      _
    %p987 = scmp.le.s32.totalorder 2, %s10
    // Predicated region
    $region41: #{cheb_conv_sat.1} parent=5 // pred_check
      %p988 = pneg %p987
    $region42: #{cheb_conv_sat.1} parent=5 // pred_check_branch
      %990 = sbr.rel (%p988) target = $region44
    $region43: #{cheb_conv_sat.1} parent=5 // pred_region
      %s991 = ssub.s32 %s10, 2
      // Predicated region
      $region45: #{cheb_conv_sat.1} parent=43 // pred_check
        %p992 = pneg %p133
      $region46: #{cheb_conv_sat.1} parent=43 // pred_check_branch
        %994 = sbr.rel (%p992) target = $region48
      $region47: #{cheb_conv_sat.1} parent=43 // pred_region
        %p995 = scmp.lt.s32.totalorder %s16, 1
        %s996 = scalar_select %p995, %s16, 1
        %s997 = smul.addr %s996, 32
        %s998 = smul.addr %s997, 8
        %s999 = scalar_lea.vmem %s4, %s998
      $region48: #{cheb_conv_sat.1} parent=43 // pred_fallthru
        _
    $region44: #{cheb_conv_sat.1} parent=5 // pred_fallthru
      _
  $region6: #{cheb_conv_sat.1} parent=0 // loop_footer
    %s14 = sadd.s32 1, %s10
  $region7: #{cheb_conv_sat.1} parent=0 // loop_footer_branch
    %9 = sbr.rel target = $region3
  $region8: #{cheb_conv_sat.1} parent=0 // loop_exit
    _

</llo_original>
